<compile_context>
chip_gen: v7x
topology: tpu7x:2x2x1
jax: 0.10.0
libtpu: 0.0.40
codegen_flags: <defaults>
</compile_context>

<pallas_src>
import math
import functools

import jax
import jax.numpy as jnp
from jax import lax
from jax.experimental import pallas as pl
from jax.experimental.pallas import tpu as pltpu


# ---------------------------------------------------------------------------
# Per-generation VMEM budgeting + tile selection helpers
# ---------------------------------------------------------------------------
def _vmem_budget_bytes():
    """Scoped-VMEM budget: 3/4 of physical VMEM (v5e/v6e 128 MiB, v7x 64 MiB)."""
    cap = None
    try:
        info = pltpu.get_tpu_info()
        for name in ("vmem_capacity_bytes", "vmem_bytes", "vmem_size_bytes"):
            cap = getattr(info, name, None)
            if cap:
                break
    except Exception:
        cap = None
    if not cap:
        cap = 64 * 1024 * 1024          # conservative fallback (v7x physical size)
    return int(min(cap * 3 // 4, 100 * 1024 * 1024))


def _pick_tile(n, candidates):
    """Largest candidate that evenly divides n, else the full extent."""
    for c in candidates:
        if n % c == 0:
            return c
    return n


def _choose_proj_tiles(S, D, itemsize, budget):
    """(tq_proj, tk) for the QKV projection: prefer the largest M tile (amortizes
    wqkv HBM streaming), then the largest reduction slice, that fit the VMEM
    budget (f32 accumulator + double-buffered weight / x / q,k,v output tiles)."""
    tq_cands = [c for c in (1024, 512, 256, 128) if S % c == 0] or [S]
    tk_cands = [c for c in (512, 256, 128) if D % c == 0] or [D]
    for tq in tq_cands:
        for tk in tk_cands:
            need = (tq * 3 * D * 4                    # f32 accumulator scratch
                    + 2 * tk * 3 * D * itemsize       # double-buffered weight slice
                    + 2 * tq * tk * itemsize          # double-buffered x tile
                    + 2 * 3 * tq * D * itemsize)      # double-buffered q/k/v out tiles
            if need <= budget - (4 << 20):            # leave compiler headroom
                return tq, tk
    return tq_cands[-1], tk_cands[-1]


# ---------------------------------------------------------------------------
# Kernel 1: QKV projection -> q/k/v in head-major (B, H, S, hd) layout.
# grid = (B, S // tq_proj, D // tk); the model-dim reduction is innermost.
# ---------------------------------------------------------------------------
def _qkv_proj_kernel(x_ref, w_ref, q_ref, k_ref, v_ref, acc_ref, *, heads, dmodel):
    kr = pl.program_id(2)
    nk = pl.num_programs(2)
    hd = dmodel // heads

    @pl.when(kr == 0)
    def _():
        acc_ref[...] = jnp.zeros_like(acc_ref)

    # (tq, tk) @ (tk, 3D) on the MXU in the native input dtype (bf16-friendly),
    # accumulated in f32 only via preferred_element_type.
    acc_ref[...] += jnp.dot(x_ref[0], w_ref[...],
                            preferred_element_type=jnp.float32)

    @pl.when(kr == nk - 1)
    def _():
        # Slice the *scratch ref* per head: (tq, hd) live ranges and direct
        # stores into the head-major outputs (no full-accumulator live value).
        for h in range(heads):
            q_ref[0, h] = acc_ref[:, h * hd:(h + 1) * hd].astype(q_ref.dtype)
            k_ref[0, h] = acc_ref[:, dmodel + h * hd:
                                  dmodel + (h + 1) * hd].astype(k_ref.dtype)
            v_ref[0, h] = acc_ref[:, 2 * dmodel + h * hd:
                                  2 * dmodel + (h + 1) * hd].astype(v_ref.dtype)


# ---------------------------------------------------------------------------
# Kernel 2: flash attention (online softmax) fused with the output projection.
# grid = (B, S // tq, H, S // tkv); head and kv axes are reductions.
# ---------------------------------------------------------------------------
def _flash_outproj_kernel(q_ref, k_ref, v_ref, wo_ref, o_ref,
                          m_sc, l_sc, acc_h, acc_o,
                          *, causal, tq, tkv, wout_resident):
    qi = pl.program_id(1)
    h = pl.program_id(2)
    kv = pl.program_id(3)
    n_h = pl.num_programs(2)
    n_kv = pl.num_programs(3)

    @pl.when(kv == 0)
    def _():
        m_sc[...] = jnp.full_like(m_sc, -jnp.inf)
        l_sc[...] = jnp.zeros_like(l_sc)
        acc_h[...] = jnp.zeros_like(acc_h)

    @pl.when(jnp.logical_and(h == 0, kv == 0))
    def _():
        acc_o[...] = jnp.zeros_like(acc_o)

    def _step(apply_mask):
        # Native-dtype (bf16) MXU inputs; f32 scores via preferred_element_type.
        # The softmax scale is pre-folded into Wq, so q needs no per-step work.
        q = q_ref[0, 0]                                              # (tq, hd)
        k = k_ref[0, 0]                                              # (tkv, hd)
        s = lax.dot_general(q, k, (((1,), (1,)), ((), ())),
                            preferred_element_type=jnp.float32)      # (tq, tkv)
        if apply_mask:   # only traced for diagonal-straddling tiles
            rows = qi * tq + lax.broadcasted_iota(jnp.int32, (tq, tkv), 0)
            cols = kv * tkv + lax.broadcasted_iota(jnp.int32, (tq, tkv), 1)
            s = jnp.where(cols <= rows, s, -1e30)
        m_prev = m_sc[...]
        m_new = jnp.maximum(m_prev, jnp.max(s, axis=-1, keepdims=True))
        alpha = jnp.exp(m_prev - m_new)
        p = jnp.exp(s - m_new)                                       # f32
        l_sc[...] = alpha * l_sc[...] + jnp.sum(p, axis=-1, keepdims=True)
        pv = jnp.dot(p.astype(v_ref.dtype), v_ref[0, 0],             # bf16 MXU PV
                     preferred_element_type=jnp.float32)             # (tq, hd)
        acc_h[...] = alpha * acc_h[...] + pv
        m_sc[...] = m_new

    if causal:
        # Fully-masked tiles: skipped (and their K/V DMAs are clamped away in
        # the index_map).  Diagonal-straddling tiles: masked.  Interior tiles:
        # mask-free (no per-element iota/compare/select VPU work).
        row_lo = qi * tq
        row_hi = (qi + 1) * tq - 1
        col_lo = kv * tkv
        col_hi = (kv + 1) * tkv - 1
        straddles = jnp.logical_and(col_lo <= row_hi, col_hi > row_lo)
        interior = col_hi <= row_lo
        pl.when(straddles)(lambda: _step(True))
        pl.when(interior)(lambda: _step(False))
    else:
        _step(False)

    @pl.when(kv == n_kv - 1)
    def _():
        # Exact normalization (outside the inner kv loop -> negligible cost),
        # then fold this head straight into the output-projection accumulator.
        inv_l = 1.0 / l_sc[...]                                      # (tq, 1)
        o_head = acc_h[...] * inv_l                                  # (tq, hd) f32
        w_h = wo_ref[h] if wout_resident else wo_ref[0]              # (hd, D)
        acc_o[...] += jnp.dot(o_head.astype(w_h.dtype), w_h,
                              preferred_element_type=jnp.float32)

    @pl.when(jnp.logical_and(h == n_h - 1, kv == n_kv - 1))
    def _():
        o_ref[0] = acc_o[...].astype(o_ref.dtype)                    # lane-dense (tq, D)


# ---------------------------------------------------------------------------
# One-time parameter layout prep (hoisted out of the per-forward path).
# ---------------------------------------------------------------------------
def prepare_attention_params(wqkv, wout, *, heads, param_dtype=None):
    """wqkv: (3D, D) torch Linear layout -> (D, 3D) with the softmax scale
    1/sqrt(hd) folded into the Q columns (exact, done in f32 at prep time);
    wout: (D, D) torch Linear layout -> (H, hd, D) per-head slices of Wout^T."""
    d = wqkv.shape[1]
    hd = d // heads
    out_dtype = param_dtype if param_dtype is not None else wqkv.dtype
    scale = 1.0 / math.sqrt(hd)
    wqkv_t = jnp.transpose(wqkv).astype(jnp.float32)               # (D, 3D)
    wqkv_t = wqkv_t.at[:, :d].multiply(scale)                      # fold scale into Wq
    wout_heads = jnp.transpose(wout).reshape(heads, hd, d)         # (H, hd, D)
    return wqkv_t.astype(out_dtype), wout_heads.astype(out_dtype)


def attention_forward(x, wqkv_t, wout_heads, *, heads, causal):
    """x: (B, S, D); wqkv_t: (D, 3D) (Q columns pre-scaled); wout_heads: (H, hd, D)."""
    B, S, D = x.shape
    assert D % heads == 0
    hd = D // heads
    assert wqkv_t.shape == (D, 3 * D)
    assert wout_heads.shape == (heads, hd, D)

    vmem_budget = _vmem_budget_bytes()
    itemsize = jnp.dtype(x.dtype).itemsize

    # --- Kernel 1: QKV projection ------------------------------------------
    tq_p, tk = _choose_proj_tiles(S, D, itemsize, vmem_budget)
    qkv_kernel = functools.partial(_qkv_proj_kernel, heads=heads, dmodel=D)
    q, k, v = pl.pallas_call(
        qkv_kernel,
        out_shape=tuple(jax.ShapeDtypeStruct((B, heads, S, hd), x.dtype)
                        for _ in range(3)),
        grid_spec=pltpu.PrefetchScalarGridSpec(
            num_scalar_prefetch=0,
            grid=(B, S // tq_p, D // tk),
            in_specs=[
                pl.BlockSpec((1, tq_p, tk), lambda b, i, kr: (b, i, kr)),
                pl.BlockSpec((tk, 3 * D), lambda b, i, kr: (kr, 0)),
            ],
            out_specs=tuple(pl.BlockSpec((1, heads, tq_p, hd),
                                         lambda b, i, kr: (b, 0, i, 0))
                            for _ in range(3)),
            scratch_shapes=[pltpu.VMEM((tq_p, 3 * D), jnp.float32)],
        ),
        compiler_params=pltpu.CompilerParams(
            dimension_semantics=("parallel", "parallel", "arbitrary"),
            vmem_limit_bytes=vmem_budget),
    )(x, wqkv_t)

    # --- Kernel 2: flash attention + fused output projection -----------------
    tq = _pick_tile(S, (256, 128))    # 256 fills the 2x256x256 MXU on v6e/v7x
    tkv = _pick_tile(S, (256, 128))

    # Keep Wout resident in VMEM (fetched once per launch) when small enough;
    # otherwise stream the per-head (hd, D) slice (safe on v7x's 64 MiB VMEM).
    wout_bytes = wout_heads.size * jnp.dtype(wout_heads.dtype).itemsize
    wout_resident = wout_bytes <= 8 * 1024 * 1024
    if wout_resident:
        wo_spec = pl.BlockSpec((heads, hd, D), lambda b, i, h, kv: (0, 0, 0))
    else:
        wo_spec = pl.BlockSpec((1, hd, D), lambda b, i, h, kv: (h, 0, 0))

    if causal:
        # Clamp the kv block index so fully-masked kv tiles revisit the already
        # fetched block: no wasted K/V HBM traffic (compute is skipped too).
        def kv_index_map(b, i, h, kv):
            last_needed = ((i + 1) * tq - 1) // tkv
            return (b, h, jnp.minimum(kv, last_needed), 0)
    else:
        def kv_index_map(b, i, h, kv):
            return (b, h, kv, 0)

    flash_kernel = functools.partial(_flash_outproj_kernel, causal=causal,
                                     tq=tq, tkv=tkv, wout_resident=wout_resident)
    out = pl.pallas_call(
        flash_kernel,
        out_shape=jax.ShapeDtypeStruct((B, S, D), x.dtype),
        grid_spec=pltpu.PrefetchScalarGridSpec(
            num_scalar_prefetch=0,
            grid=(B, S // tq, heads, S // tkv),
            in_specs=[
                pl.BlockSpec((1, 1, tq, hd), lambda b, i, h, kv: (b, h, i, 0)),
                pl.BlockSpec((1, 1, tkv, hd), kv_index_map),
                pl.BlockSpec((1, 1, tkv, hd), kv_index_map),
                wo_spec,
            ],
            out_specs=pl.BlockSpec((1, tq, D), lambda b, i, h, kv: (b, i, 0)),
            scratch_shapes=[
                pltpu.VMEM((tq, 1), jnp.float32),    # running max
                pltpu.VMEM((tq, 1), jnp.float32),    # running denominator
                pltpu.VMEM((tq, hd), jnp.float32),   # per-head PV accumulator
                pltpu.VMEM((tq, D), jnp.float32),    # output-projection accumulator
            ],
        ),
        compiler_params=pltpu.CompilerParams(
            dimension_semantics=("parallel", "parallel", "arbitrary", "arbitrary"),
            vmem_limit_bytes=vmem_budget),
    )(q, k, v, wout_heads)
    return out


# ---------------------------------------------------------------------------
# Init + pure-JAX reference + self-test
# ---------------------------------------------------------------------------
def _init_kaiming_uniform(key, shape, fan_in, scale):
    range_ = scale * (3.0 / fan_in) ** 0.5
    return jax.random.uniform(key, shape, dtype=jnp.float32,
                              minval=-range_, maxval=range_)


def _reference(x, wqkv, wout, heads, causal):
    B, S, D = x.shape
    hd = D // heads
    proj = x @ wqkv.T                                            # (B, S, 3D)
    q, k, v = jnp.split(proj, 3, axis=-1)

    def split_heads(t):
        return t.reshape(B, S, heads, hd).transpose(0, 2, 1, 3)  # (B, H, S, hd)

    q, k, v = split_heads(q), split_heads(k), split_heads(v)
    scores = jnp.einsum("bhqd,bhkd->bhqk", q, k) / math.sqrt(hd)
    if causal:
        row = jnp.arange(S)[:, None]
        col = jnp.arange(S)[None, :]
        scores = jnp.where(col <= row, scores, -1e30)
    p = jax.nn.softmax(scores, axis=-1)
    out = jnp.einsum("bhqk,bhkd->bhqd", p, v)                    # (B, H, S, hd)
    out = out.transpose(0, 2, 1, 3).reshape(B, S, D)
    return out @ wout.T


def _run_case(key, *, B, S, D, H, causal, dtype, tol):
    kx, kw1, kw2 = jax.random.split(key, 3)
    x = jax.random.normal(kx, (B, S, D), dtype=jnp.float32)
    # PyTorch Linear weight shapes: (out_features, in_features), fan_in = dmodel.
    wqkv = _init_kaiming_uniform(kw1, (3 * D, D), fan_in=D, scale=1.0)
    wout = _init_kaiming_uniform(kw2, (D, D), fan_in=D, scale=1.0)

    x_in = x.astype(dtype)
    wqkv_t, wout_heads = prepare_attention_params(wqkv, wout, heads=H,
                                                  param_dtype=dtype)
    out = attention_forward(x_in, wqkv_t, wout_heads, heads=H, causal=causal)
    out = jax.block_until_ready(out)

    # f32 reference on the (de)quantized inputs, so only kernel-internal
    # rounding / online-softmax ordering contributes to the error.
    ref = _reference(x_in.astype(jnp.float32),
                     wqkv.astype(dtype).astype(jnp.float32),
                     wout.astype(dtype).astype(jnp.float32), H, causal)
    assert out.shape == (B, S, D)
    out32 = out.astype(jnp.float32)
    max_err = float(jnp.max(jnp.abs(out32 - ref)))
    assert jnp.allclose(out32, ref, atol=tol, rtol=tol), (
        f"mismatch vs reference (max |err|={max_err}, shape={(B, S, D, H)}, dtype={dtype})")


if __name__ == "__main__":
    key = jax.random.PRNGKey(0)
    k1, k2, k3 = jax.random.split(key, 3)

    # Small canonical shape (batch=2, seq=8, dmodel=32, heads=4), f32, causal.
    _run_case(k1, B=2, S=8, D=32, H=4, causal=True, dtype=jnp.float32, tol=2e-2)
    # Shape that exercises real tiling: multiple q/kv tiles, causal DMA clamp,
    # straddle / interior / skipped mask paths, multi-head fused epilogue.
    _run_case(k2, B=1, S=512, D=256, H=4, causal=True, dtype=jnp.float32, tol=2e-2)
    # bf16 (MXU-native) dtype path + non-causal branch.
    _run_case(k3, B=2, S=8, D=32, H=4, causal=False, dtype=jnp.bfloat16, tol=6e-2)

    print("KERNEL_OK")
</pallas_src>

<mosaic_0001>
module attributes {stable_mosaic.version = 11 : i64} {
  func.func @_qkv_proj_kernel(%arg0: i32, %arg1: i32, %arg2: i32, %arg3: memref<1x8x32xf32, #tpu.memory_space<vmem>>, %arg4: memref<32x96xf32, #tpu.memory_space<vmem>>, %arg5: memref<1x4x8x8xf32, #tpu.memory_space<vmem>>, %arg6: memref<1x4x8x8xf32, #tpu.memory_space<vmem>>, %arg7: memref<1x4x8x8xf32, #tpu.memory_space<vmem>>, %arg8: memref<8x96xf32, #tpu.memory_space<vmem>>) attributes {dimension_semantics = [#tpu.dimension_semantics<parallel>, #tpu.dimension_semantics<parallel>, #tpu.dimension_semantics<arbitrary>], iteration_bounds = array<i64: 2, 1, 1>, scalar_prefetch = 0 : i64, scratch_operands = 1 : i64, tpu.core_type = #tpu.core_type<tc>, window_params = [{transform_indices = @transform_0, window_bounds = array<i64: 1, 8, 32>}, {transform_indices = @transform_1, window_bounds = array<i64: 32, 96>}, {transform_indices = @transform_2, window_bounds = array<i64: 1, 4, 8, 8>}, {transform_indices = @transform_3, window_bounds = array<i64: 1, 4, 8, 8>}, {transform_indices = @transform_4, window_bounds = array<i64: 1, 4, 8, 8>}]} {
    %c0_i32 = arith.constant 0 : i32
    %0 = arith.cmpi eq, %arg2, %c0_i32 : i32
    %1 = arith.extui %0 : i1 to i32
    %c0_i32_0 = arith.constant 0 : i32
    %2 = arith.cmpi ne, %1, %c0_i32_0 : i32
    scf.if %2 {
      %cst_11 = arith.constant 0.000000e+00 : f32
      %13 = vector.broadcast %cst_11 : f32 to vector<8x96xf32>
      %c0_12 = arith.constant 0 : index
      %c0_13 = arith.constant 0 : index
      %14 = vector.load %arg8[%c0_12, %c0_13] : memref<8x96xf32, #tpu.memory_space<vmem>>, vector<8x96xf32>
      tpu.vector_store %arg8[%c0_12, %c0_13], %13 {strides = array<i32>} : memref<8x96xf32, #tpu.memory_space<vmem>>, vector<8x96xf32>,
    } else {
    }
    %c0 = arith.constant 0 : index
    %c0_1 = arith.constant 0 : index
    %3 = vector.load %arg8[%c0, %c0_1] : memref<8x96xf32, #tpu.memory_space<vmem>>, vector<8x96xf32>
    %c0_2 = arith.constant 0 : index
    %c0_3 = arith.constant 0 : index
    %c0_4 = arith.constant 0 : index
    %4 = vector.load %arg3[%c0_2, %c0_3, %c0_4] : memref<1x8x32xf32, #tpu.memory_space<vmem>>, vector<1x8x32xf32>
    %5 = vector.shape_cast %4 : vector<1x8x32xf32> to vector<8x32xf32>
    %c0_5 = arith.constant 0 : index
    %c0_6 = arith.constant 0 : index
    %6 = vector.load %arg4[%c0_5, %c0_6] : memref<32x96xf32, #tpu.memory_space<vmem>>, vector<32x96xf32>
    %cst = arith.constant dense<0.000000e+00> : vector<8x96xf32>
    %7 = tpu.matmul %5, %6, %cst {dimension_numbers = #tpu.dot_dimension_numbers<[1], [0], [0], [1], [0, 0, 1, 1], [], []>} : vector<8x32xf32>, vector<32x96xf32>, vector<8x96xf32> -> vector<8x96xf32>
    %8 = arith.addf %3, %7 : vector<8x96xf32>
    %c0_7 = arith.constant 0 : index
    %c0_8 = arith.constant 0 : index
    %9 = vector.load %arg8[%c0_7, %c0_8] : memref<8x96xf32, #tpu.memory_space<vmem>>, vector<8x96xf32>
    tpu.vector_store %arg8[%c0_7, %c0_8], %8 {strides = array<i32>} : memref<8x96xf32, #tpu.memory_space<vmem>>, vector<8x96xf32>,
    %c0_i32_9 = arith.constant 0 : i32
    %10 = arith.cmpi eq, %arg2, %c0_i32_9 : i32
    %11 = arith.extui %10 : i1 to i32
    %c0_i32_10 = arith.constant 0 : i32
    %12 = arith.cmpi ne, %11, %c0_i32_10 : i32
    scf.if %12 {
      %c0_11 = arith.constant 0 : index
      %c0_12 = arith.constant 0 : index
      %13 = vector.load %arg8[%c0_11, %c0_12] : memref<8x96xf32, #tpu.memory_space<vmem>>, vector<8x8xf32>
      %c0_13 = arith.constant 0 : index
      %c0_14 = arith.constant 0 : index
      %c0_15 = arith.constant 0 : index
      %c0_16 = arith.constant 0 : index
      %14 = vector.load %arg5[%c0_13, %c0_14, %c0_15, %c0_16] : memref<1x4x8x8xf32, #tpu.memory_space<vmem>>, vector<1x1x8x8xf32>
      %15 = vector.shape_cast %14 : vector<1x1x8x8xf32> to vector<8x8xf32>
      %16 = vector.shape_cast %13 : vector<8x8xf32> to vector<1x1x8x8xf32>
      tpu.vector_store %arg5[%c0_13, %c0_14, %c0_15, %c0_16], %16 {strides = array<i32>} : memref<1x4x8x8xf32, #tpu.memory_space<vmem>>, vector<1x1x8x8xf32>,
      %c0_17 = arith.constant 0 : index
      %c32 = arith.constant 32 : index
      %17 = vector.load %arg8[%c0_17, %c32] : memref<8x96xf32, #tpu.memory_space<vmem>>, vector<8x8xf32>
      %c0_18 = arith.constant 0 : index
      %c0_19 = arith.constant 0 : index
      %c0_20 = arith.constant 0 : index
      %c0_21 = arith.constant 0 : index
      %18 = vector.load %arg6[%c0_18, %c0_19, %c0_20, %c0_21] : memref<1x4x8x8xf32, #tpu.memory_space<vmem>>, vector<1x1x8x8xf32>
      %19 = vector.shape_cast %18 : vector<1x1x8x8xf32> to vector<8x8xf32>
      %20 = vector.shape_cast %17 : vector<8x8xf32> to vector<1x1x8x8xf32>
      tpu.vector_store %arg6[%c0_18, %c0_19, %c0_20, %c0_21], %20 {strides = array<i32>} : memref<1x4x8x8xf32, #tpu.memory_space<vmem>>, vector<1x1x8x8xf32>,
      %c0_22 = arith.constant 0 : index
      %c64 = arith.constant 64 : index
      %21 = vector.load %arg8[%c0_22, %c64] : memref<8x96xf32, #tpu.memory_space<vmem>>, vector<8x8xf32>
      %c0_23 = arith.constant 0 : index
      %c0_24 = arith.constant 0 : index
      %c0_25 = arith.constant 0 : index
      %c0_26 = arith.constant 0 : index
      %22 = vector.load %arg7[%c0_23, %c0_24, %c0_25, %c0_26] : memref<1x4x8x8xf32, #tpu.memory_space<vmem>>, vector<1x1x8x8xf32>
      %23 = vector.shape_cast %22 : vector<1x1x8x8xf32> to vector<8x8xf32>
      %24 = vector.shape_cast %21 : vector<8x8xf32> to vector<1x1x8x8xf32>
      tpu.vector_store %arg7[%c0_23, %c0_24, %c0_25, %c0_26], %24 {strides = array<i32>} : memref<1x4x8x8xf32, #tpu.memory_space<vmem>>, vector<1x1x8x8xf32>,
      %c0_27 = arith.constant 0 : index
      %c8 = arith.constant 8 : index
      %25 = vector.load %arg8[%c0_27, %c8] : memref<8x96xf32, #tpu.memory_space<vmem>>, vector<8x8xf32>
      %c0_28 = arith.constant 0 : index
      %c1 = arith.constant 1 : index
      %c0_29 = arith.constant 0 : index
      %c0_30 = arith.constant 0 : index
      %26 = vector.load %arg5[%c0_28, %c1, %c0_29, %c0_30] : memref<1x4x8x8xf32, #tpu.memory_space<vmem>>, vector<1x1x8x8xf32>
      %27 = vector.shape_cast %26 : vector<1x1x8x8xf32> to vector<8x8xf32>
      %28 = vector.shape_cast %25 : vector<8x8xf32> to vector<1x1x8x8xf32>
      tpu.vector_store %arg5[%c0_28, %c1, %c0_29, %c0_30], %28 {strides = array<i32>} : memref<1x4x8x8xf32, #tpu.memory_space<vmem>>, vector<1x1x8x8xf32>,
      %c0_31 = arith.constant 0 : index
      %c40 = arith.constant 40 : index
      %29 = vector.load %arg8[%c0_31, %c40] : memref<8x96xf32, #tpu.memory_space<vmem>>, vector<8x8xf32>
      %c0_32 = arith.constant 0 : index
      %c1_33 = arith.constant 1 : index
      %c0_34 = arith.constant 0 : index
      %c0_35 = arith.constant 0 : index
      %30 = vector.load %arg6[%c0_32, %c1_33, %c0_34, %c0_35] : memref<1x4x8x8xf32, #tpu.memory_space<vmem>>, vector<1x1x8x8xf32>
      %31 = vector.shape_cast %30 : vector<1x1x8x8xf32> to vector<8x8xf32>
      %32 = vector.shape_cast %29 : vector<8x8xf32> to vector<1x1x8x8xf32>
      tpu.vector_store %arg6[%c0_32, %c1_33, %c0_34, %c0_35], %32 {strides = array<i32>} : memref<1x4x8x8xf32, #tpu.memory_space<vmem>>, vector<1x1x8x8xf32>,
      %c0_36 = arith.constant 0 : index
      %c72 = arith.constant 72 : index
      %33 = vector.load %arg8[%c0_36, %c72] : memref<8x96xf32, #tpu.memory_space<vmem>>, vector<8x8xf32>
      %c0_37 = arith.constant 0 : index
      %c1_38 = arith.constant 1 : index
      %c0_39 = arith.constant 0 : index
      %c0_40 = arith.constant 0 : index
      %34 = vector.load %arg7[%c0_37, %c1_38, %c0_39, %c0_40] : memref<1x4x8x8xf32, #tpu.memory_space<vmem>>, vector<1x1x8x8xf32>
      %35 = vector.shape_cast %34 : vector<1x1x8x8xf32> to vector<8x8xf32>
      %36 = vector.shape_cast %33 : vector<8x8xf32> to vector<1x1x8x8xf32>
      tpu.vector_store %arg7[%c0_37, %c1_38, %c0_39, %c0_40], %36 {strides = array<i32>} : memref<1x4x8x8xf32, #tpu.memory_space<vmem>>, vector<1x1x8x8xf32>,
      %c0_41 = arith.constant 0 : index
      %c16 = arith.constant 16 : index
      %37 = vector.load %arg8[%c0_41, %c16] : memref<8x96xf32, #tpu.memory_space<vmem>>, vector<8x8xf32>
      %c0_42 = arith.constant 0 : index
      %c2 = arith.constant 2 : index
      %c0_43 = arith.constant 0 : index
      %c0_44 = arith.constant 0 : index
      %38 = vector.load %arg5[%c0_42, %c2, %c0_43, %c0_44] : memref<1x4x8x8xf32, #tpu.memory_space<vmem>>, vector<1x1x8x8xf32>
      %39 = vector.shape_cast %38 : vector<1x1x8x8xf32> to vector<8x8xf32>
      %40 = vector.shape_cast %37 : vector<8x8xf32> to vector<1x1x8x8xf32>
      tpu.vector_store %arg5[%c0_42, %c2, %c0_43, %c0_44], %40 {strides = array<i32>} : memref<1x4x8x8xf32, #tpu.memory_space<vmem>>, vector<1x1x8x8xf32>,
      %c0_45 = arith.constant 0 : index
      %c48 = arith.constant 48 : index
      %41 = vector.load %arg8[%c0_45, %c48] : memref<8x96xf32, #tpu.memory_space<vmem>>, vector<8x8xf32>
      %c0_46 = arith.constant 0 : index
      %c2_47 = arith.constant 2 : index
      %c0_48 = arith.constant 0 : index
      %c0_49 = arith.constant 0 : index
      %42 = vector.load %arg6[%c0_46, %c2_47, %c0_48, %c0_49] : memref<1x4x8x8xf32, #tpu.memory_space<vmem>>, vector<1x1x8x8xf32>
      %43 = vector.shape_cast %42 : vector<1x1x8x8xf32> to vector<8x8xf32>
      %44 = vector.shape_cast %41 : vector<8x8xf32> to vector<1x1x8x8xf32>
      tpu.vector_store %arg6[%c0_46, %c2_47, %c0_48, %c0_49], %44 {strides = array<i32>} : memref<1x4x8x8xf32, #tpu.memory_space<vmem>>, vector<1x1x8x8xf32>,
      %c0_50 = arith.constant 0 : index
      %c80 = arith.constant 80 : index
      %45 = vector.load %arg8[%c0_50, %c80] : memref<8x96xf32, #tpu.memory_space<vmem>>, vector<8x8xf32>
      %c0_51 = arith.constant 0 : index
      %c2_52 = arith.constant 2 : index
      %c0_53 = arith.constant 0 : index
      %c0_54 = arith.constant 0 : index
      %46 = vector.load %arg7[%c0_51, %c2_52, %c0_53, %c0_54] : memref<1x4x8x8xf32, #tpu.memory_space<vmem>>, vector<1x1x8x8xf32>
      %47 = vector.shape_cast %46 : vector<1x1x8x8xf32> to vector<8x8xf32>
      %48 = vector.shape_cast %45 : vector<8x8xf32> to vector<1x1x8x8xf32>
      tpu.vector_store %arg7[%c0_51, %c2_52, %c0_53, %c0_54], %48 {strides = array<i32>} : memref<1x4x8x8xf32, #tpu.memory_space<vmem>>, vector<1x1x8x8xf32>,
      %c0_55 = arith.constant 0 : index
      %c24 = arith.constant 24 : index
      %49 = vector.load %arg8[%c0_55, %c24] : memref<8x96xf32, #tpu.memory_space<vmem>>, vector<8x8xf32>
      %c0_56 = arith.constant 0 : index
      %c3 = arith.constant 3 : index
      %c0_57 = arith.constant 0 : index
      %c0_58 = arith.constant 0 : index
      %50 = vector.load %arg5[%c0_56, %c3, %c0_57, %c0_58] : memref<1x4x8x8xf32, #tpu.memory_space<vmem>>, vector<1x1x8x8xf32>
      %51 = vector.shape_cast %50 : vector<1x1x8x8xf32> to vector<8x8xf32>
      %52 = vector.shape_cast %49 : vector<8x8xf32> to vector<1x1x8x8xf32>
      tpu.vector_store %arg5[%c0_56, %c3, %c0_57, %c0_58], %52 {strides = array<i32>} : memref<1x4x8x8xf32, #tpu.memory_space<vmem>>, vector<1x1x8x8xf32>,
      %c0_59 = arith.constant 0 : index
      %c56 = arith.constant 56 : index
      %53 = vector.load %arg8[%c0_59, %c56] : memref<8x96xf32, #tpu.memory_space<vmem>>, vector<8x8xf32>
      %c0_60 = arith.constant 0 : index
      %c3_61 = arith.constant 3 : index
      %c0_62 = arith.constant 0 : index
      %c0_63 = arith.constant 0 : index
      %54 = vector.load %arg6[%c0_60, %c3_61, %c0_62, %c0_63] : memref<1x4x8x8xf32, #tpu.memory_space<vmem>>, vector<1x1x8x8xf32>
      %55 = vector.shape_cast %54 : vector<1x1x8x8xf32> to vector<8x8xf32>
      %56 = vector.shape_cast %53 : vector<8x8xf32> to vector<1x1x8x8xf32>
      tpu.vector_store %arg6[%c0_60, %c3_61, %c0_62, %c0_63], %56 {strides = array<i32>} : memref<1x4x8x8xf32, #tpu.memory_space<vmem>>, vector<1x1x8x8xf32>,
      %c0_64 = arith.constant 0 : index
      %c88 = arith.constant 88 : index
      %57 = vector.load %arg8[%c0_64, %c88] : memref<8x96xf32, #tpu.memory_space<vmem>>, vector<8x8xf32>
      %c0_65 = arith.constant 0 : index
      %c3_66 = arith.constant 3 : index
      %c0_67 = arith.constant 0 : index
      %c0_68 = arith.constant 0 : index
      %58 = vector.load %arg7[%c0_65, %c3_66, %c0_67, %c0_68] : memref<1x4x8x8xf32, #tpu.memory_space<vmem>>, vector<1x1x8x8xf32>
      %59 = vector.shape_cast %58 : vector<1x1x8x8xf32> to vector<8x8xf32>
      %60 = vector.shape_cast %57 : vector<8x8xf32> to vector<1x1x8x8xf32>
      tpu.vector_store %arg7[%c0_65, %c3_66, %c0_67, %c0_68], %60 {strides = array<i32>} : memref<1x4x8x8xf32, #tpu.memory_space<vmem>>, vector<1x1x8x8xf32>,
    } else {
    }
    return
  }
  func.func @transform_0(%arg0: i32, %arg1: i32, %arg2: i32) -> (i32, i32, i32) {
    %c0_i32 = arith.constant 0 : i32
    return %arg0, %arg1, %arg2 : i32, i32, i32
  }
  func.func @transform_1(%arg0: i32, %arg1: i32, %arg2: i32) -> (i32, i32) {
    %c0_i32 = arith.constant 0 : i32
    %c0_i32_0 = arith.constant 0 : i32
    return %arg2, %c0_i32 : i32, i32
  }
  func.func @transform_2(%arg0: i32, %arg1: i32, %arg2: i32) -> (i32, i32, i32, i32) {
    %c0_i32 = arith.constant 0 : i32
    %c0_i32_0 = arith.constant 0 : i32
    %c0_i32_1 = arith.constant 0 : i32
    return %arg0, %c0_i32, %arg1, %c0_i32_0 : i32, i32, i32, i32
  }
  func.func @transform_3(%arg0: i32, %arg1: i32, %arg2: i32) -> (i32, i32, i32, i32) {
    %c0_i32 = arith.constant 0 : i32
    %c0_i32_0 = arith.constant 0 : i32
    %c0_i32_1 = arith.constant 0 : i32
    return %arg0, %c0_i32, %arg1, %c0_i32_0 : i32, i32, i32, i32
  }
  func.func @transform_4(%arg0: i32, %arg1: i32, %arg2: i32) -> (i32, i32, i32, i32) {
    %c0_i32 = arith.constant 0 : i32
    %c0_i32_0 = arith.constant 0 : i32
    %c0_i32_1 = arith.constant 0 : i32
    return %arg0, %c0_i32, %arg1, %c0_i32_0 : i32, i32, i32, i32
  }
}

</mosaic_0001>

<llo_original>
// kernel: tpu_custom_call.1
$region0: #{tpu_custom_call.1}
  #allocation0 [shape = 'u32[]', space=smem, size = 0x4, offset = 0x4, fixed_abs, tag = 'smem constant byte address 0x4 - core index']
  #allocation1 [shape = 'u32[144,128]{1,0:T(1,128)}', space=vmem, size = 0x12000, scoped, tag = 'internal scratch']
  #allocation2 [shape = 'f32[8,96]{1,0:T(8,128)}', space=vmem, size = 0x1000, scoped, tag = 'scratch operand']
  %s0 = inlined_call_operand.hbm [shape: f32[2,8,32], index: 0, kind: input, shape index: {}]
  %s1 = inlined_call_operand.hbm [shape: f32[32,96], index: 1, kind: input, shape index: {}]
  %s2 = inlined_call_operand.hbm [shape: f32[2,4,8,8], index: 2, kind: output, shape index: {0}]
  %s3 = inlined_call_operand.hbm [shape: f32[2,4,8,8], index: 3, kind: output, shape index: {1}]
  %s4 = inlined_call_operand.hbm [shape: f32[2,4,8,8], index: 4, kind: output, shape index: {2}]
  %5 = xla_tuple %s2, %s3, %s4
  %s6 = sld [smem:[#allocation0]]
  $region73: #{tpu_custom_call.1} parent=0
    _
  %s8 = ssub.s32 1, %s6
  %s9 = scalar_select 0, %s8, %s6
  $region1: #{tpu_custom_call.1} parent=0
    #allocation3 [shape = 'u8[8192]{0}', space=vmem, size = 0x2000, scoped, tag = 'input window, operand 0']
    #allocation4 [shape = 's32[2]{0}', space=sflag, size = 0x8, scoped, tag = 'scoped memory for tpu_custom_call.1']
    #allocation5 [shape = 's32[2]{0}', space=sflag, size = 0x8, scoped, tag = 'scoped memory for tpu_custom_call.1']
    #allocation6 [shape = 'u8[16384]{0}', space=vmem, size = 0x4000, scoped, tag = 'input window, operand 1, single buffered']
    #allocation7 [shape = 's32[1]{0}', space=sflag, size = 0x4, scoped, tag = 'scoped memory for tpu_custom_call.1']
    #allocation8 [shape = 'u8[32768]{0}', space=vmem, size = 0x8000, scoped, tag = 'output window, operand 0']
    #allocation9 [shape = 'u8[32768]{0}', space=vmem, size = 0x8000, scoped, tag = 'output window, operand 1']
    #allocation10 [shape = 's32[2]{0}', space=sflag, size = 0x8, scoped, tag = 'scoped memory for tpu_custom_call.1']
    #allocation11 [shape = 'u8[32768]{0}', space=vmem, size = 0x8000, scoped, tag = 'output window, operand 2']
    %10 = vsyncpa [#allocation4], 0
    %s11 = scalar_lea.sflag [#allocation4], 1
    %12 = vsyncpa %s11, 0
    %13 = vsyncpa [#allocation7], 0
    %14 = vsyncpa [#allocation5], 0
    %s15 = scalar_lea.sflag [#allocation5], 1
    %16 = vsyncpa %s15, 0
    %17 = vsyncpa [#allocation10], 0
    %s18 = scalar_lea.sflag [#allocation10], 1
    %19 = vsyncpa %s18, 0
    loop: start=0, step=1, limit=4
    $region2: #{tpu_custom_call.1} parent=1 // loop_pre_header
      _
    $region3: #{tpu_custom_call.1} parent=1 // loop_header
      %s21 = sphi 0, %s25
      %p22 = scmp.ge.s32.totalorder %s21, 4
      %s28 = sphi 0, %s47
      %s29 = sphi 0, %s43
      %s30 = sphi 0, %s39
      %s31 = sphi 0, %s28
      %s32 = sphi 0, %s29
      %s33 = sphi 0, %s30
      %s34 = sphi 0, %s31
      %s35 = sphi 0, %s32
      %s36 = sphi 0, %s33
      %s54 = sphi 0, %s56
      %s57 = sphi 0, %s54
      %s58 = sphi 0, %s57
      %s74 = sphi 0, %s58
      %s80 = sphi 0, %s82
      %s83 = sphi 0, %s80
      %s84 = sphi 0, %s83
      %s100 = sphi 0, %s84
      %s108 = sphi 0, %s110
      %s111 = sphi 0, %s108
      %s112 = sphi 0, %s111
      %s128 = sphi 0, %s112
      %s136 = sphi 0, %s138
      %s139 = sphi 0, %s136
      %s140 = sphi 0, %s139
      %s156 = sphi 0, %s140
      %s164 = sphi 0, %s166
      %s167 = sphi 0, %s164
      %s168 = sphi 0, %s167
      %s184 = sphi 0, %s168
    $region4: #{tpu_custom_call.1} parent=1 // loop_header_branch
      %24 = sbr.rel (%p22) target = $region8
    $region5: #{tpu_custom_call.1} parent=1 // loop_body
      %s26 = ssub.s32 %s21, 1
      %s27 = ssub.s32 %s21, 2
      %s37 = sadd.s32 1, %s30
      %p38 = scmp.ge.s32.totalorder %s37, 1
      %s39 = scalar_select %p38, 0, %s37
      %s40 = sadd.s32 1, %s29
      %s41 = scalar_select %p38, %s40, %s29
      %p42 = scmp.ge.s32.totalorder %s41, 1
      %s43 = scalar_select %p42, 0, %s41
      %s44 = sadd.s32 1, %s28
      %s45 = scalar_select %p42, %s44, %s28
      %p46 = scmp.ge.s32.totalorder %s45, 2
      %s47 = scalar_select %p46, 0, %s45
      %s48 = ssub.s32 %s28, %s47
      %s49 = ssub.s32 %s29, %s43
      %s50 = sor.u32 %s48, %s49
      %s51 = ssub.s32 %s30, %s39
      %s52 = sor.u32 %s50, %s51
      %p53 = scmp.eq.s32.totalorder %s52, 0
      %s55 = sadd.s32 %s54, 1
      %s56 = scalar_select %p53, %s54, %s55
      %p59 = pneg %p53
      %p60 = scmp.eq.s32.totalorder %s21, 1
      %p61 = por %p59, %p60
      %p62 = scmp.ne.s32.totalorder %s54, %s57
      %p63 = scmp.eq.s32.totalorder %s21, 0
      %p64 = por %p62, %p63
      %p65 = scmp.ne.s32.totalorder %s54, %s57
      %p66 = scmp.eq.s32.totalorder %s26, 1
      %p67 = por %p65, %p66
      %p68 = scmp.ne.s32.totalorder %s57, %s58
      %p69 = scmp.eq.s32.totalorder %s26, 0
      %p70 = por %p68, %p69
      %p71 = scmp.ne.s32.totalorder %s57, %s58
      %p72 = scmp.eq.s32.totalorder %s27, 1
      %p73 = por %p71, %p72
      %p75 = scmp.ne.s32.totalorder %s58, %s74
      %p76 = scmp.eq.s32.totalorder %s27, 0
      %p77 = por %p75, %p76
      %s78 = ssub.s32 %s30, %s39
      %p79 = scmp.eq.s32.totalorder %s78, 0
      %s81 = sadd.s32 %s80, 1
      %s82 = scalar_select %p79, %s80, %s81
      %p85 = pneg %p79
      %p86 = scmp.eq.s32.totalorder %s21, 1
      %p87 = por %p85, %p86
      %p88 = scmp.ne.s32.totalorder %s80, %s83
      %p89 = scmp.eq.s32.totalorder %s21, 0
      %p90 = por %p88, %p89
      %p91 = scmp.ne.s32.totalorder %s80, %s83
      %p92 = scmp.eq.s32.totalorder %s26, 1
      %p93 = por %p91, %p92
      %p94 = scmp.ne.s32.totalorder %s83, %s84
      %p95 = scmp.eq.s32.totalorder %s26, 0
      %p96 = por %p94, %p95
      %p97 = scmp.ne.s32.totalorder %s83, %s84
      %p98 = scmp.eq.s32.totalorder %s27, 1
      %p99 = por %p97, %p98
      %p101 = scmp.ne.s32.totalorder %s84, %s100
      %p102 = scmp.eq.s32.totalorder %s27, 0
      %p103 = por %p101, %p102
      %s104 = ssub.s32 %s28, %s47
      %s105 = ssub.s32 %s29, %s43
      %s106 = sor.u32 %s104, %s105
      %p107 = scmp.eq.s32.totalorder %s106, 0
      %s109 = sadd.s32 %s108, 1
      %s110 = scalar_select %p107, %s108, %s109
      %p113 = pneg %p107
      %p114 = scmp.eq.s32.totalorder %s21, 1
      %p115 = por %p113, %p114
      %p116 = scmp.ne.s32.totalorder %s108, %s111
      %p117 = scmp.eq.s32.totalorder %s21, 0
      %p118 = por %p116, %p117
      %p119 = scmp.ne.s32.totalorder %s108, %s111
      %p120 = scmp.eq.s32.totalorder %s26, 1
      %p121 = por %p119, %p120
      %p122 = scmp.ne.s32.totalorder %s111, %s112
      %p123 = scmp.eq.s32.totalorder %s26, 0
      %p124 = por %p122, %p123
      %p125 = scmp.ne.s32.totalorder %s111, %s112
      %p126 = scmp.eq.s32.totalorder %s27, 1
      %p127 = por %p125, %p126
      %p129 = scmp.ne.s32.totalorder %s112, %s128
      %p130 = scmp.eq.s32.totalorder %s27, 0
      %p131 = por %p129, %p130
      %s132 = ssub.s32 %s28, %s47
      %s133 = ssub.s32 %s29, %s43
      %s134 = sor.u32 %s132, %s133
      %p135 = scmp.eq.s32.totalorder %s134, 0
      %s137 = sadd.s32 %s136, 1
      %s138 = scalar_select %p135, %s136, %s137
      %p141 = pneg %p135
      %p142 = scmp.eq.s32.totalorder %s21, 1
      %p143 = por %p141, %p142
      %p144 = scmp.ne.s32.totalorder %s136, %s139
      %p145 = scmp.eq.s32.totalorder %s21, 0
      %p146 = por %p144, %p145
      %p147 = scmp.ne.s32.totalorder %s136, %s139
      %p148 = scmp.eq.s32.totalorder %s26, 1
      %p149 = por %p147, %p148
      %p150 = scmp.ne.s32.totalorder %s139, %s140
      %p151 = scmp.eq.s32.totalorder %s26, 0
      %p152 = por %p150, %p151
      %p153 = scmp.ne.s32.totalorder %s139, %s140
      %p154 = scmp.eq.s32.totalorder %s27, 1
      %p155 = por %p153, %p154
      %p157 = scmp.ne.s32.totalorder %s140, %s156
      %p158 = scmp.eq.s32.totalorder %s27, 0
      %p159 = por %p157, %p158
      %s160 = ssub.s32 %s28, %s47
      %s161 = ssub.s32 %s29, %s43
      %s162 = sor.u32 %s160, %s161
      %p163 = scmp.eq.s32.totalorder %s162, 0
      %s165 = sadd.s32 %s164, 1
      %s166 = scalar_select %p163, %s164, %s165
      %p169 = pneg %p163
      %p170 = scmp.eq.s32.totalorder %s21, 1
      %p171 = por %p169, %p170
      %p172 = scmp.ne.s32.totalorder %s164, %s167
      %p173 = scmp.eq.s32.totalorder %s21, 0
      %p174 = por %p172, %p173
      %p175 = scmp.ne.s32.totalorder %s164, %s167
      %p176 = scmp.eq.s32.totalorder %s26, 1
      %p177 = por %p175, %p176
      %p178 = scmp.ne.s32.totalorder %s167, %s168
      %p179 = scmp.eq.s32.totalorder %s26, 0
      %p180 = por %p178, %p179
      %p181 = scmp.ne.s32.totalorder %s167, %s168
      %p182 = scmp.eq.s32.totalorder %s27, 1
      %p183 = por %p181, %p182
      %p185 = scmp.ne.s32.totalorder %s168, %s184
      %p186 = scmp.eq.s32.totalorder %s27, 0
      %p187 = por %p185, %p186
      %p188 = scmp.le.s32.totalorder 1, %s21
      %p189 = scmp.lt.s32.totalorder %s21, 3
      %p190 = pnand %p188, %p189
      %p191 = pneg %p190
      // Predicated region
      $region9: #{tpu_custom_call.1} parent=5 // pred_check
        _
      $region10: #{tpu_custom_call.1} parent=5 // pred_check_branch
        %193 = sbr.rel (%p190) target = $region12
      $region11: #{tpu_custom_call.1} parent=5 // pred_region
        %s194 = ssub.s32 %s21, 1
        // Predicated region
        $region13: #{tpu_custom_call.1} parent=11 // pred_check
          %p195 = pneg %p96
        $region14: #{tpu_custom_call.1} parent=11 // pred_check_branch
          %197 = sbr.rel (%p195) target = $region16
        $region15: #{tpu_custom_call.1} parent=11 // pred_region
          %s198 = smul.u32 4, %s33
          %s200 = ssub.s32 512, 512
          %201 = vsyncadd [#allocation7], %s200
          %s202 = smul.addr %s198, 128
          %s203 = scalar_lea.hbm %s1, %s202
          %s204 = sshll.u32 [#allocation6], 4
          %s205 = int_to_ptr.vmem [resolvable:$true] %s204
          %210 = dma.hbm_to_vmem [thread:$0]  %s203, 512, %s205, [#allocation7], 128, 128, 8
        $region16: #{tpu_custom_call.1} parent=11 // pred_fallthru
          _
      $region12: #{tpu_custom_call.1} parent=5 // pred_fallthru
        _
      %p211 = scmp.lt.s32.totalorder %s21, 2
      // Predicated region
      $region17: #{tpu_custom_call.1} parent=5 // pred_check
        %p212 = pneg %p211
      $region18: #{tpu_custom_call.1} parent=5 // pred_check_branch
        %214 = sbr.rel (%p212) target = $region20
      $region19: #{tpu_custom_call.1} parent=5 // pred_region
        // Predicated region
        $region21: #{tpu_custom_call.1} parent=19 // pred_check
          %p215 = pneg %p64
        $region22: #{tpu_custom_call.1} parent=19 // pred_check_branch
          %217 = sbr.rel (%p215) target = $region24
        $region23: #{tpu_custom_call.1} parent=19 // pred_region
          %s218 = sand.u32 %s54, 1
          %s219 = scalar_lea.sflag [#allocation4], %s218
          %s220 = sand.u32 %s54, 1
          %s221 = smul.addr %s220, 8
          %s222 = scalar_lea.vmem [#allocation3], %s221
          %s224 = ssub.s32 128, 128
          %225 = vsyncadd %s219, %s224
          %s226 = sadd.s32 %s30, %s29
          %s227 = sadd.s32 %s226, %s28
          %s228 = smul.addr %s227, 128
          %s229 = scalar_lea.hbm %s0, %s228
          %s231 = sshll.u32 %s222, 4
          %s232 = int_to_ptr.vmem [resolvable:$true] %s231
          %234 = dma.hbm_to_vmem [thread:$0]  %s229, 128, %s232, %s219
        $region24: #{tpu_custom_call.1} parent=19 // pred_fallthru
          _
      $region20: #{tpu_custom_call.1} parent=5 // pred_fallthru
        _
      %p235 = scmp.le.s32.totalorder 1, %s21
      %p236 = scmp.lt.s32.totalorder %s21, 3
      %p237 = pnand %p235, %p236
      %p238 = pneg %p237
      // Predicated region
      $region25: #{tpu_custom_call.1} parent=5 // pred_check
        _
      $region26: #{tpu_custom_call.1} parent=5 // pred_check_branch
        %240 = sbr.rel (%p237) target = $region28
      $region27: #{tpu_custom_call.1} parent=5 // pred_region
        %s241 = ssub.s32 %s21, 1
        %s242 = sand.u32 %s57, 1
        %s243 = scalar_lea.sflag [#allocation4], %s242
        %s244 = sand.u32 %s57, 1
        %s245 = smul.addr %s244, 8
        %s246 = scalar_lea.vmem [#allocation3], %s245
        // Predicated region
        $region29: #{tpu_custom_call.1} parent=27 // pred_check
          %p247 = pneg %p70
        $region30: #{tpu_custom_call.1} parent=27 // pred_check_branch
          %249 = sbr.rel (%p247) target = $region32
        $region31: #{tpu_custom_call.1} parent=27 // pred_region
          %250 = dma.done %s243, 128
        $region32: #{tpu_custom_call.1} parent=27 // pred_fallthru
          _
        // Predicated region
        $region33: #{tpu_custom_call.1} parent=27 // pred_check
          %p251 = pneg %p96
        $region34: #{tpu_custom_call.1} parent=27 // pred_check_branch
          %253 = sbr.rel (%p251) target = $region36
        $region35: #{tpu_custom_call.1} parent=27 // pred_region
          %254 = dma.done [#allocation7], 512
        $region36: #{tpu_custom_call.1} parent=27 // pred_fallthru
          _
        %s255 = sand.u32 %s57, 1
        %s256 = scalar_lea.sflag [#allocation4], %s255
        %s257 = sand.u32 %s57, 1
        %s258 = smul.addr %s257, 8
        %s259 = scalar_lea.vmem [#allocation3], %s258
        %p260 = pneg %p70
        %p261 = pneg %p67
        %p262 = pneg %p96
        %p263 = pneg %p93
        %p264 = pneg %p124
        %p265 = pneg %p121
        %s266 = sand.u32 %s111, 1
        %s267 = scalar_lea.sflag [#allocation5], %s266
        %s268 = sand.u32 %s111, 1
        %s269 = smul.addr %s268, 32
        %s270 = scalar_lea.vmem [#allocation8], %s269
        %p271 = pneg %p152
        %p272 = pneg %p149
        %s273 = sand.u32 %s26, 1
        %s274 = scalar_lea.sflag [#allocation10], %s273
        %s275 = sand.u32 %s139, 1
        %s276 = smul.addr %s275, 32
        %s277 = scalar_lea.vmem [#allocation9], %s276
        %p278 = pneg %p180
        %p279 = pneg %p177
        %s280 = sand.u32 %s26, 1
        %s281 = scalar_lea.sflag [#allocation10], %s280
        %s282 = sand.u32 %s167, 1
        %s283 = smul.addr %s282, 32
        %s284 = scalar_lea.vmem [#allocation11], %s283
        %s285 = smul.u32 4, %s33
        %p286 = scmp.eq.s32.totalorder %s33, 0
        // Predicated region
        $region37: #{tpu_custom_call.1} parent=27 // pred_check
          %p287 = pneg %p286
        $region38: #{tpu_custom_call.1} parent=27 // pred_check_branch
          %289 = sbr.rel (%p287) target = $region40
        $region39: #{tpu_custom_call.1} parent=27 // pred_region
          %vm290 = vcmask 785408
          %291 = vst.msk [vmem:[#allocation2] sm:$0xff] %vm290, 0.0
        $region40: #{tpu_custom_call.1} parent=27 // pred_fallthru
          _
        %v292 = vld [vmem:[#allocation2] sm:$0xff]
        %v293 = vld [vmem:[%s246] sm:$0xff]
        %v294 = vld [vmem:[#allocation6] sm:$0xff]
        %v295 = vld [vmem:[#allocation6 + $0x8] sm:$0xff]
        %v296 = vld [vmem:[#allocation6 + $0x10] sm:$0xff]
        %v297 = vld [vmem:[#allocation6 + $0x18] sm:$0xff]
        %vm298 = vcmask 261120
        %v300 = vsel %vm298, %v293, 0
        %302 = vmatprep.subr.mxu0 0.0
        %303 = vmatpush1.msra.mxu0 %v294
        %304 = vmatprep.subr.mxu0 0.0
        %305 = vmatpush1.msra.mxu0 %v295
        %306 = vmatprep.subr.mxu0 0.0
        %307 = vmatpush1.msra.mxu0 %v296
        %308 = vmatprep.subr.mxu0 0.0
        %309 = vmatpush1.msra.mxu0 %v297
        %310 = vmatprep.subr.mxu0 0.0
        %311 = vmatpush1.msra.mxu0 0.0
        %312 = vmatprep.subr.mxu0 0.0
        %313 = vmatpush1.msra.mxu0 0.0
        %314 = vmatprep.subr.mxu0 0.0
        %315 = vmatpush1.msra.mxu0 0.0
        %316 = vmatprep.subr.mxu0 0.0
        %317 = vmatpush1.msra.mxu0 0.0
        %318 = vmatprep.subr.mxu0 0.0
        %319 = vmatpush1.msra.mxu0 0.0
        %320 = vmatprep.subr.mxu0 0.0
        %321 = vmatpush1.msra.mxu0 0.0
        %322 = vmatprep.subr.mxu0 0.0
        %323 = vmatpush1.msra.mxu0 0.0
        %324 = vmatprep.subr.mxu0 0.0
        %325 = vmatpush1.msra.mxu0 0.0
        %326 = vmatprep.subr.mxu0 0.0
        %327 = vmatpush1.msra.mxu0 0.0
        %328 = vmatprep.subr.mxu0 0.0
        %329 = vmatpush1.msra.mxu0 0.0
        %330 = vmatprep.subr.mxu0 0.0
        %331 = vmatpush1.msra.mxu0 0.0
        %332 = vmatprep.subr.mxu0 0.0
        %333 = vmatpush1.msra.mxu0 0.0
        %334 = vmatprep.subr.mxu0 0.0
        %335 = vmatpush1.msra.mxu0 0.0
        %336 = vmatprep.subr.mxu0 0.0
        %337 = vmatpush1.msra.mxu0 0.0
        %338 = vmatprep.subr.mxu0 0.0
        %339 = vmatpush1.msra.mxu0 0.0
        %340 = vmatprep.subr.mxu0 0.0
        %341 = vmatpush1.msra.mxu0 0.0
        %342 = vmatprep.subr.mxu0 0.0
        %343 = vmatpush1.msra.mxu0 0.0
        %344 = vmatprep.subr.mxu0 0.0
        %345 = vmatpush1.msra.mxu0 0.0
        %346 = vmatprep.subr.mxu0 0.0
        %347 = vmatpush1.msra.mxu0 0.0
        %348 = vmatprep.subr.mxu0 0.0
        %349 = vmatpush1.msra.mxu0 0.0
        %350 = vmatprep.subr.mxu0 0.0
        %351 = vmatpush1.msra.mxu0 0.0
        %352 = vmatprep.subr.mxu0 0.0
        %353 = vmatpush1.msra.mxu0 0.0
        %354 = vmatprep.subr.mxu0 0.0
        %355 = vmatpush1.msra.mxu0 0.0
        %356 = vmatprep.subr.mxu0 0.0
        %357 = vmatpush1.msra.mxu0 0.0
        %358 = vmatprep.subr.mxu0 0.0
        %359 = vmatpush1.msra.mxu0 0.0
        %360 = vmatprep.subr.mxu0 0.0
        %361 = vmatpush1.msra.mxu0 0.0
        %362 = vmatprep.subr.mxu0 0.0
        %363 = vmatpush1.msra.mxu0 0.0
        %364 = vmatprep.subr.mxu0 0.0
        %365 = vmatpush1.msra.mxu0 0.0
        %366 = vmatprep.mubr.f32.mxu0 0.0
        %367 = vmatmul.mubr.f32.gmra.mrb[0].mxu0 %v300
        %v368 = vpop.f32.mrb[0].mxu0
        %v369 = vadd.f32 0.0, %v368
        %v370 = vpop.f32.mrb[0].mxu0
        %371 = vdwg.mxu0
        %v372 = vadd.f32 %v292, %v369
        %vm373 = vcmask 785408
        %374 = vst.msk [vmem:[#allocation2] sm:$0xff] %vm373, %v372
        // Predicated region
        $region41: #{tpu_custom_call.1} parent=27 // pred_check
          %p375 = pneg %p286
        $region42: #{tpu_custom_call.1} parent=27 // pred_check_branch
          %377 = sbr.rel (%p375) target = $region44
        $region43: #{tpu_custom_call.1} parent=27 // pred_region
          %v378 = vld [vmem:[#allocation2] sm:$0xff]
          %vm379 = vcmask 64512
          %380 = vst.msk [vmem:[%s270] sm:$0xff] %vm379, %v378
          %v381 = vld [vmem:[#allocation2] sm:$0xff]
          %383 = vrot.lane.b32.xlu0 %v381, 96
          %v384 = vpop.permute.xlu0 %383
          %386 = vst.msk [vmem:[%s277] sm:$0xff] %vm379, %v384
          %v387 = vld [vmem:[#allocation2] sm:$0xff]
          %389 = vrot.lane.b32.xlu0 %v387, 64
          %v390 = vpop.permute.xlu0 %389
          %392 = vst.msk [vmem:[%s284] sm:$0xff] %vm379, %v390
          %v393 = vld [vmem:[#allocation2] sm:$0xff]
          %395 = vrot.lane.b32.xlu0 %v393, 120
          %v396 = vpop.permute.xlu0 %395
          %s398 = scalar_lea.vmem %s270, 8 [#allocation8]
          %399 = vst.msk [vmem:[%s398] sm:$0xff] %vm379, %v396
          %v400 = vld [vmem:[#allocation2] sm:$0xff]
          %402 = vrot.lane.b32.xlu0 %v400, 88
          %v403 = vpop.permute.xlu0 %402
          %s405 = scalar_lea.vmem %s277, 8 [#allocation9]
          %406 = vst.msk [vmem:[%s405] sm:$0xff] %vm379, %v403
          %v407 = vld [vmem:[#allocation2] sm:$0xff]
          %409 = vrot.lane.b32.xlu0 %v407, 56
          %v410 = vpop.permute.xlu0 %409
          %s412 = scalar_lea.vmem %s284, 8 [#allocation11]
          %413 = vst.msk [vmem:[%s412] sm:$0xff] %vm379, %v410
          %v414 = vld [vmem:[#allocation2] sm:$0xff]
          %416 = vrot.lane.b32.xlu0 %v414, 112
          %v417 = vpop.permute.xlu0 %416
          %s419 = scalar_lea.vmem %s270, 16 [#allocation8]
          %420 = vst.msk [vmem:[%s419] sm:$0xff] %vm379, %v417
          %v421 = vld [vmem:[#allocation2] sm:$0xff]
          %423 = vrot.lane.b32.xlu0 %v421, 80
          %v424 = vpop.permute.xlu0 %423
          %s426 = scalar_lea.vmem %s277, 16 [#allocation9]
          %427 = vst.msk [vmem:[%s426] sm:$0xff] %vm379, %v424
          %v428 = vld [vmem:[#allocation2] sm:$0xff]
          %430 = vrot.lane.b32.xlu0 %v428, 48
          %v431 = vpop.permute.xlu0 %430
          %s433 = scalar_lea.vmem %s284, 16 [#allocation11]
          %434 = vst.msk [vmem:[%s433] sm:$0xff] %vm379, %v431
          %v435 = vld [vmem:[#allocation2] sm:$0xff]
          %437 = vrot.lane.b32.xlu0 %v435, 104
          %v438 = vpop.permute.xlu0 %437
          %s440 = scalar_lea.vmem %s270, 24 [#allocation8]
          %441 = vst.msk [vmem:[%s440] sm:$0xff] %vm379, %v438
          %v442 = vld [vmem:[#allocation2] sm:$0xff]
          %444 = vrot.lane.b32.xlu0 %v442, 72
          %v445 = vpop.permute.xlu0 %444
          %s447 = scalar_lea.vmem %s277, 24 [#allocation9]
          %448 = vst.msk [vmem:[%s447] sm:$0xff] %vm379, %v445
          %v449 = vld [vmem:[#allocation2] sm:$0xff]
          %451 = vrot.lane.b32.xlu0 %v449, 40
          %v452 = vpop.permute.xlu0 %451
          %s454 = scalar_lea.vmem %s284, 24 [#allocation11]
          %455 = vst.msk [vmem:[%s454] sm:$0xff] %vm379, %v452
        $region44: #{tpu_custom_call.1} parent=27 // pred_fallthru
          _
        %s456 = sand.u32 %s111, 1
        %s457 = scalar_lea.sflag [#allocation5], %s456
        %s458 = sand.u32 %s111, 1
        %s459 = smul.addr %s458, 32
        %s460 = scalar_lea.vmem [#allocation8], %s459
        %s461 = sand.u32 %s26, 1
        %s462 = scalar_lea.sflag [#allocation10], %s461
        %s463 = sand.u32 %s139, 1
        %s464 = smul.addr %s463, 32
        %s465 = scalar_lea.vmem [#allocation9], %s464
        %s466 = sand.u32 %s26, 1
        %s467 = scalar_lea.sflag [#allocation10], %s466
        %s468 = sand.u32 %s167, 1
        %s469 = smul.addr %s468, 32
        %s470 = scalar_lea.vmem [#allocation11], %s469
        // Predicated region
        $region45: #{tpu_custom_call.1} parent=27 // pred_check
          %p471 = pneg %p121
        $region46: #{tpu_custom_call.1} parent=27 // pred_check_branch
          %473 = sbr.rel (%p471) target = $region48
        $region47: #{tpu_custom_call.1} parent=27 // pred_region
          %s475 = ssub.s32 512, 512
          %476 = vsyncadd %s457, %s475
          %s477 = smul.addr %s31, 4
          %s478 = sadd.s32 %s32, %s477
          %s479 = smul.addr %s478, 128
          %s480 = scalar_lea.hbm %s2, %s479
          %s481 = sshll.u32 %s460, 4
          %s482 = int_to_ptr.vmem [resolvable:$true] %s481
          %487 = dma.vmem_to_hbm [thread:$0]  %s482, 512, %s480, %s457, 128, 128, 8
        $region48: #{tpu_custom_call.1} parent=27 // pred_fallthru
          _
        // Predicated region
        $region49: #{tpu_custom_call.1} parent=27 // pred_check
          %p488 = pneg %p149
        $region50: #{tpu_custom_call.1} parent=27 // pred_check_branch
          %490 = sbr.rel (%p488) target = $region52
        $region51: #{tpu_custom_call.1} parent=27 // pred_region
          %s492 = ssub.s32 512, 512
          %493 = vsyncadd %s462, %s492
          %s494 = smul.addr %s31, 4
          %s495 = sadd.s32 %s32, %s494
          %s496 = smul.addr %s495, 128
          %s497 = scalar_lea.hbm %s3, %s496
          %s498 = sshll.u32 %s465, 4
          %s499 = int_to_ptr.vmem [resolvable:$true] %s498
          %504 = dma.vmem_to_hbm [thread:$0]  %s499, 512, %s497, %s462, 128, 128, 8
        $region52: #{tpu_custom_call.1} parent=27 // pred_fallthru
          _
        // Predicated region
        $region53: #{tpu_custom_call.1} parent=27 // pred_check
          %p505 = pneg %p177
        $region54: #{tpu_custom_call.1} parent=27 // pred_check_branch
          %507 = sbr.rel (%p505) target = $region56
        $region55: #{tpu_custom_call.1} parent=27 // pred_region
          %s509 = ssub.s32 512, 512
          %510 = vsyncadd %s467, %s509
          %s511 = smul.addr %s31, 4
          %s512 = sadd.s32 %s32, %s511
          %s513 = smul.addr %s512, 128
          %s514 = scalar_lea.hbm %s4, %s513
          %s515 = sshll.u32 %s470, 4
          %s516 = int_to_ptr.vmem [resolvable:$true] %s515
          %521 = dma.vmem_to_hbm [thread:$0]  %s516, 512, %s514, %s467, 128, 128, 8
        $region56: #{tpu_custom_call.1} parent=27 // pred_fallthru
          _
      $region28: #{tpu_custom_call.1} parent=5 // pred_fallthru
        _
      %p522 = scmp.le.s32.totalorder 2, %s21
      // Predicated region
      $region57: #{tpu_custom_call.1} parent=5 // pred_check
        %p523 = pneg %p522
      $region58: #{tpu_custom_call.1} parent=5 // pred_check_branch
        %525 = sbr.rel (%p523) target = $region60
      $region59: #{tpu_custom_call.1} parent=5 // pred_region
        %s526 = ssub.s32 %s21, 2
        // Predicated region
        $region61: #{tpu_custom_call.1} parent=59 // pred_check
          %p527 = pneg %p127
        $region62: #{tpu_custom_call.1} parent=59 // pred_check_branch
          %529 = sbr.rel (%p527) target = $region64
        $region63: #{tpu_custom_call.1} parent=59 // pred_region
          %s530 = sand.u32 %s112, 1
          %s531 = scalar_lea.sflag [#allocation5], %s530
          %s532 = sand.u32 %s112, 1
          %s533 = smul.addr %s532, 32
          %s534 = scalar_lea.vmem [#allocation8], %s533
          %535 = dma.done %s531, 512
        $region64: #{tpu_custom_call.1} parent=59 // pred_fallthru
          _
        // Predicated region
        $region65: #{tpu_custom_call.1} parent=59 // pred_check
          %p536 = pneg %p155
        $region66: #{tpu_custom_call.1} parent=59 // pred_check_branch
          %538 = sbr.rel (%p536) target = $region68
        $region67: #{tpu_custom_call.1} parent=59 // pred_region
          %s539 = sand.u32 %s27, 1
          %s540 = scalar_lea.sflag [#allocation10], %s539
          %s541 = sand.u32 %s140, 1
          %s542 = smul.addr %s541, 32
          %s543 = scalar_lea.vmem [#allocation9], %s542
          %544 = dma.done %s540, 512
        $region68: #{tpu_custom_call.1} parent=59 // pred_fallthru
          _
        // Predicated region
        $region69: #{tpu_custom_call.1} parent=59 // pred_check
          %p545 = pneg %p183
        $region70: #{tpu_custom_call.1} parent=59 // pred_check_branch
          %547 = sbr.rel (%p545) target = $region72
        $region71: #{tpu_custom_call.1} parent=59 // pred_region
          %s548 = sand.u32 %s27, 1
          %s549 = scalar_lea.sflag [#allocation10], %s548
          %s550 = sand.u32 %s168, 1
          %s551 = smul.addr %s550, 32
          %s552 = scalar_lea.vmem [#allocation11], %s551
          %553 = dma.done %s549, 512
        $region72: #{tpu_custom_call.1} parent=59 // pred_fallthru
          _
      $region60: #{tpu_custom_call.1} parent=5 // pred_fallthru
        _
    $region6: #{tpu_custom_call.1} parent=1 // loop_footer
      %s25 = sadd.s32 1, %s21
    $region7: #{tpu_custom_call.1} parent=1 // loop_footer_branch
      %20 = sbr.rel target = $region3
    $region8: #{tpu_custom_call.1} parent=1 // loop_exit
      _
    %554 = vsyncpa [#allocation4], 1
    %s555 = scalar_lea.sflag [#allocation4], 1
    %556 = vsyncpa %s555, 1
    %557 = vsyncpa [#allocation7], 1
    %558 = vsyncpa [#allocation5], 1
    %s559 = scalar_lea.sflag [#allocation5], 1
    %560 = vsyncpa %s559, 1
    %561 = vsyncpa [#allocation10], 1
    %s562 = scalar_lea.sflag [#allocation10], 1
    %563 = vsyncpa %s562, 1

</llo_original>
